<compile_context>
chip_gen: v6e
topology: v6e:2x2x1
jax: 0.10.0
libtpu: 0.0.40
codegen_flags: <defaults>
</compile_context>

<pallas_src>
import jax
import jax.numpy as jnp
import numpy as np
from jax.experimental import pallas as pl
from jax.experimental.pallas import tpu as pltpu

# ---- dimensions implied by the PyTorch module ------------------------------
CAT = ['travel', 'unbox', 'challenge', 'culture', 'game', 'personal', 'talk',
       'education', 'music']
PERL = ['摩羯座', '水瓶座', '雙魚座', '牡羊座', '金牛座', '雙子座', '巨蟹座',
        '獅子座', '處女座', '天秤座', '天蠍座', '射手座']
SEXL = ['F', 'M', 'G']
WHODICT = {}

FEATUREDIM = len(SEXL) + len(PERL) + len(CAT) + 1 + len(WHODICT)  # 25
IN_DIM = 2 * FEATUREDIM + len(CAT)   # 59
H1 = 50
H2 = 20
OUT_DIM = 1

# Rows per grid step (~1 MB of f32 x per step).  Sweep 4096/8192/16384 for peak
# HBM bandwidth; keep nb = cdiv(B, tile_b) >= 2 on v7x (two TensorCores).
TILE_B = 4096


def _round_up(n, m):
    return ((n + m - 1) // m) * m


# ---- Pallas kernel: one batch tile of the MLP forward pass ------------------
def mlp_kernel(x_ref, w1_ref, b1_ref, w2_ref, b2_ref, w3_ref, b3_ref, o_ref):
    x = x_ref[...]                                               # (tile_b, 59)
    # Layers 1 & 2 on the MXU in the input dtype (bf16-native when x is bf16),
    # accumulating in f32; bias/ReLU tail kept in f32 (v5e has no bf16 VPU).
    h1 = jnp.dot(x, w1_ref[...], preferred_element_type=jnp.float32) + b1_ref[...]
    h1 = jnp.maximum(h1, 0.0).astype(w2_ref.dtype)               # (tile_b, 50)
    h2 = jnp.dot(h1, w2_ref[...], preferred_element_type=jnp.float32) + b2_ref[...]
    h2 = jnp.maximum(h2, 0.0)                                    # (tile_b, 20) f32
    # Final (20 -> 1) layer: VPU elementwise mul + XLU row-reduce instead of an
    # N=1 MXU matmul (which would waste a full MXU pass on a single column).
    z = jnp.sum(h2 * w3_ref[...], axis=-1, keepdims=True) + b3_ref[...]
    # sigmoid(z) = 1 / (1 + exp(-z)); EUP approx reciprocal is nearly free.
    o_ref[...] = pl.reciprocal(1.0 + jnp.exp(-z), approx=True).astype(o_ref.dtype)


def binary_classification_forward(x, params, *, tile_b=TILE_B):
    """x: (B, 59) float32 or bfloat16 -> (B, 1) float32 probabilities."""
    w1, b1, w2, b2, w3, b3 = params
    B = x.shape[0]
    assert x.shape[1] == IN_DIM

    itemsize = jnp.dtype(x.dtype).itemsize
    # Sublane granule for the batch (second-minor) axis of the x tile.
    granule = 8 * max(1, 4 // itemsize)                 # f32: 8 rows, bf16: 16
    tile_b = int(min(tile_b, _round_up(B, granule)))
    tile_b = max(granule, _round_up(tile_b, granule))
    nb = pl.cdiv(B, tile_b)
    # NOTE: no padded copy of x.  The final partial block (if any) relies on
    # Pallas' partial-block handling: out-of-bounds input rows read unspecified
    # data, but every row is independent and out-of-bounds output rows are
    # masked on writeback, so valid rows are unaffected.

    # MXU operands in the input dtype; bias / final-layer weights stay f32.
    w1c = w1.astype(x.dtype)
    w2c = w2.astype(x.dtype)
    b1r = b1.reshape(1, H1).astype(jnp.float32)
    b2r = b2.reshape(1, H2).astype(jnp.float32)
    w3r = w3.reshape(1, H2).astype(jnp.float32)        # (1, H2) row for VPU broadcast
    b3r = b3.reshape(1, OUT_DIM).astype(jnp.float32)

    x_spec = pl.BlockSpec((tile_b, IN_DIM), lambda i: (i, 0))
    out_spec = pl.BlockSpec((tile_b, OUT_DIM), lambda i: (i, 0))
    # Constant index_map -> weights/biases stay VMEM-resident across the grid.
    const = lambda shape: pl.BlockSpec(shape, lambda i: (0, 0))

    flops = 2 * B * (IN_DIM * H1 + H1 * H2 + H2 * OUT_DIM)
    param_bytes = (IN_DIM * H1 + H1 * H2) * itemsize + 4 * (H1 + 2 * H2 + OUT_DIM)
    cost = pl.CostEstimate(
        flops=flops,
        transcendentals=2 * B,                           # exp + reciprocal per row
        bytes_accessed=B * (IN_DIM * itemsize + OUT_DIM * 4) + param_bytes,
    )

    # Explicit scoped-VMEM budget: double-buffered x tile + activation temps,
    # floored at 32 MiB (raises v5e's 16 MiB default), capped for v7x (64 MiB
    # physical VMEM per TensorCore).
    act_bytes = tile_b * (H1 + H2 + OUT_DIM) * 4
    vmem_limit = int(2 * tile_b * IN_DIM * itemsize + 6 * act_bytes + (4 << 20))
    vmem_limit = min(max(vmem_limit, 32 << 20), 48 << 20)

    out = pl.pallas_call(
        mlp_kernel,
        out_shape=jax.ShapeDtypeStruct((B, OUT_DIM), jnp.float32),
        grid_spec=pltpu.PrefetchScalarGridSpec(
            num_scalar_prefetch=0,
            grid=(nb,),
            in_specs=[
                x_spec,
                const((IN_DIM, H1)), const((1, H1)),
                const((H1, H2)),     const((1, H2)),
                const((1, H2)),      const((1, OUT_DIM)),
            ],
            out_specs=out_spec,
        ),
        compiler_params=pltpu.CompilerParams(
            dimension_semantics=("parallel",),   # batch axis shards across TCs on v7x
            vmem_limit_bytes=vmem_limit,
        ),
        cost_estimate=cost,
    )(x, w1c, b1r, w2c, b2r, w3r, b3r)

    return out


# ---- deterministic parameter initialization (PyTorch-style uniform bounds) --
def init_params(key):
    def linear(key, fan_in, fan_out):
        kw, kb = jax.random.split(key)
        bound = 1.0 / jnp.sqrt(float(fan_in))
        w = jax.random.uniform(kw, (fan_in, fan_out), jnp.float32, -bound, bound)
        b = jax.random.uniform(kb, (1, fan_out), jnp.float32, -bound, bound)
        return w, b

    k1, k2, k3 = jax.random.split(key, 3)
    w1, b1 = linear(k1, IN_DIM, H1)
    w2, b2 = linear(k2, H1, H2)
    w3, b3 = linear(k3, H2, OUT_DIM)
    return (w1, b1, w2, b2, w3, b3)


# ---- pure-numpy float64 reference (forward-pass spec) -----------------------
def numpy_reference(x, params):
    w1, b1, w2, b2, w3, b3 = [np.asarray(p, dtype=np.float64) for p in params]
    xx = np.asarray(x, dtype=np.float64)
    h1 = np.maximum(xx @ w1 + b1, 0.0)
    h2 = np.maximum(h1 @ w2 + b2, 0.0)
    z = h2 @ w3 + b3
    return (1.0 / (1.0 + np.exp(-z))).astype(np.float32)


if __name__ == "__main__":
    key = jax.random.PRNGKey(0)
    k_x, k_p = jax.random.split(key)
    params = init_params(k_p)

    # (1) f32 path, small batch, single full tile.
    B = 64
    x = jax.random.normal(k_x, (B, IN_DIM), dtype=jnp.float32)
    out = jax.block_until_ready(binary_classification_forward(x, params))
    assert out.shape == (B, OUT_DIM), out.shape
    out_np = np.asarray(out)
    assert np.all((out_np > 0.0) & (out_np < 1.0))
    ref = numpy_reference(x, params)
    assert np.allclose(out_np, ref, atol=5e-3, rtol=0.0), float(np.abs(out_np - ref).max())

    # (2) f32 path with a partial final tile (B % tile_b != 0): exercises the
    # no-pad path — garbage rows are masked on writeback, valid rows unaffected.
    B2 = 200
    x2 = jax.random.normal(jax.random.PRNGKey(1), (B2, IN_DIM), dtype=jnp.float32)
    out2 = jax.block_until_ready(binary_classification_forward(x2, params, tile_b=128))
    assert out2.shape == (B2, OUT_DIM), out2.shape
    ref2 = numpy_reference(x2, params)
    assert np.allclose(np.asarray(out2), ref2, atol=5e-3, rtol=0.0)

    # (3) bf16 input path: halves the dominant HBM traffic; MXU matmuls in bf16,
    # f32 accumulation and f32 tail.
    xb = x.astype(jnp.bfloat16)
    outb = jax.block_until_ready(binary_classification_forward(xb, params))
    assert outb.shape == (B, OUT_DIM), outb.shape
    assert np.allclose(np.asarray(outb), ref, atol=5e-2, rtol=0.0)

    print("KERNEL_OK")
</pallas_src>

<mosaic_0001>
module attributes {stable_mosaic.version = 11 : i64} {
  func.func @mlp_kernel(%arg0: i32, %arg1: memref<64x59xf32, #tpu.memory_space<vmem>>, %arg2: memref<59x50xf32, #tpu.memory_space<vmem>>, %arg3: memref<1x50xf32, #tpu.memory_space<vmem>>, %arg4: memref<50x20xf32, #tpu.memory_space<vmem>>, %arg5: memref<1x20xf32, #tpu.memory_space<vmem>>, %arg6: memref<1x20xf32, #tpu.memory_space<vmem>>, %arg7: memref<1x1xf32, #tpu.memory_space<vmem>>, %arg8: memref<64x1xf32, #tpu.memory_space<vmem>>) attributes {dimension_semantics = [#tpu.dimension_semantics<parallel>], iteration_bounds = array<i64: 1>, scalar_prefetch = 0 : i64, scratch_operands = 0 : i64, tpu.core_type = #tpu.core_type<tc>, window_params = [{transform_indices = @transform_0, window_bounds = array<i64: 64, 59>}, {pipeline_mode = #tpu.pipeline_mode<synchronous>, transform_indices = @transform_1, window_bounds = array<i64: 59, 50>}, {pipeline_mode = #tpu.pipeline_mode<synchronous>, transform_indices = @transform_2, window_bounds = array<i64: 1, 50>}, {pipeline_mode = #tpu.pipeline_mode<synchronous>, transform_indices = @transform_3, window_bounds = array<i64: 50, 20>}, {pipeline_mode = #tpu.pipeline_mode<synchronous>, transform_indices = @transform_4, window_bounds = array<i64: 1, 20>}, {pipeline_mode = #tpu.pipeline_mode<synchronous>, transform_indices = @transform_5, window_bounds = array<i64: 1, 20>}, {pipeline_mode = #tpu.pipeline_mode<synchronous>, transform_indices = @transform_6, window_bounds = array<i64: 1, 1>}, {transform_indices = @transform_7, window_bounds = array<i64: 64, 1>}]} {
    %c0 = arith.constant 0 : index
    %c0_0 = arith.constant 0 : index
    %0 = vector.load %arg1[%c0, %c0_0] : memref<64x59xf32, #tpu.memory_space<vmem>>, vector<64x59xf32>
    %c0_1 = arith.constant 0 : index
    %c0_2 = arith.constant 0 : index
    %1 = vector.load %arg2[%c0_1, %c0_2] : memref<59x50xf32, #tpu.memory_space<vmem>>, vector<59x50xf32>
    %cst = arith.constant dense<0.000000e+00> : vector<64x50xf32>
    %2 = tpu.matmul %0, %1, %cst {dimension_numbers = #tpu.dot_dimension_numbers<[1], [0], [0], [1], [0, 0, 1, 1], [], []>} : vector<64x59xf32>, vector<59x50xf32>, vector<64x50xf32> -> vector<64x50xf32>
    %c0_3 = arith.constant 0 : index
    %c0_4 = arith.constant 0 : index
    %3 = vector.load %arg3[%c0_3, %c0_4] : memref<1x50xf32, #tpu.memory_space<vmem>>, vector<1x50xf32>
    %4 = vector.broadcast %3 : vector<1x50xf32> to vector<64x50xf32>
    %5 = arith.addf %2, %4 : vector<64x50xf32>
    %cst_5 = arith.constant 0.000000e+00 : f32
    %6 = vector.broadcast %cst_5 : f32 to vector<64x50xf32>
    %7 = arith.maximumf %5, %6 : vector<64x50xf32>
    %c0_6 = arith.constant 0 : index
    %c0_7 = arith.constant 0 : index
    %8 = vector.load %arg4[%c0_6, %c0_7] : memref<50x20xf32, #tpu.memory_space<vmem>>, vector<50x20xf32>
    %cst_8 = arith.constant dense<0.000000e+00> : vector<64x20xf32>
    %9 = tpu.matmul %7, %8, %cst_8 {dimension_numbers = #tpu.dot_dimension_numbers<[1], [0], [0], [1], [0, 0, 1, 1], [], []>} : vector<64x50xf32>, vector<50x20xf32>, vector<64x20xf32> -> vector<64x20xf32>
    %c0_9 = arith.constant 0 : index
    %c0_10 = arith.constant 0 : index
    %10 = vector.load %arg5[%c0_9, %c0_10] : memref<1x20xf32, #tpu.memory_space<vmem>>, vector<1x20xf32>
    %11 = vector.broadcast %10 : vector<1x20xf32> to vector<64x20xf32>
    %12 = arith.addf %9, %11 : vector<64x20xf32>
    %cst_11 = arith.constant 0.000000e+00 : f32
    %13 = vector.broadcast %cst_11 : f32 to vector<64x20xf32>
    %14 = arith.maximumf %12, %13 : vector<64x20xf32>
    %c0_12 = arith.constant 0 : index
    %c0_13 = arith.constant 0 : index
    %15 = vector.load %arg6[%c0_12, %c0_13] : memref<1x20xf32, #tpu.memory_space<vmem>>, vector<1x20xf32>
    %16 = vector.broadcast %15 : vector<1x20xf32> to vector<64x20xf32>
    %17 = arith.mulf %14, %16 : vector<64x20xf32>
    %cst_14 = arith.constant dense<0.000000e+00> : vector<64xf32>
    %18 = vector.multi_reduction <add>, %17, %cst_14 [1] : vector<64x20xf32> to vector<64xf32>
    %19 = vector.shape_cast %18 : vector<64xf32> to vector<64x1xf32>
    %c0_15 = arith.constant 0 : index
    %c0_16 = arith.constant 0 : index
    %20 = vector.load %arg7[%c0_15, %c0_16] : memref<1x1xf32, #tpu.memory_space<vmem>>, vector<1x1xf32>
    %21 = vector.broadcast %20 : vector<1x1xf32> to vector<64x1xf32>
    %22 = arith.addf %19, %21 : vector<64x1xf32>
    %cst_17 = arith.constant 0.000000e+00 : f32
    %23 = vector.broadcast %cst_17 : f32 to vector<64x1xf32>
    %24 = arith.subf %23, %22 : vector<64x1xf32>
    %25 = math.exp %24 : vector<64x1xf32>
    %cst_18 = arith.constant 1.000000e+00 : f32
    %26 = vector.broadcast %cst_18 : f32 to vector<64x1xf32>
    %27 = arith.addf %26, %25 : vector<64x1xf32>
    %28 = tpu.reciprocal %27 {approx = true} : vector<64x1xf32> -> vector<64x1xf32>
    %c0_19 = arith.constant 0 : index
    %c0_20 = arith.constant 0 : index
    %29 = vector.load %arg8[%c0_19, %c0_20] : memref<64x1xf32, #tpu.memory_space<vmem>>, vector<64x1xf32>
    tpu.vector_store %arg8[%c0_19, %c0_20], %28 {strides = array<i32>} : memref<64x1xf32, #tpu.memory_space<vmem>>, vector<64x1xf32>,
    return
  }
  func.func @transform_0(%arg0: i32) -> (i32, i32) {
    %c0_i32 = arith.constant 0 : i32
    %c0_i32_0 = arith.constant 0 : i32
    return %arg0, %c0_i32 : i32, i32
  }
  func.func @transform_1(%arg0: i32) -> (i32, i32) {
    %c0_i32 = arith.constant 0 : i32
    %c0_i32_0 = arith.constant 0 : i32
    %c0_i32_1 = arith.constant 0 : i32
    return %c0_i32, %c0_i32_0 : i32, i32
  }
  func.func @transform_2(%arg0: i32) -> (i32, i32) {
    %c0_i32 = arith.constant 0 : i32
    %c0_i32_0 = arith.constant 0 : i32
    %c0_i32_1 = arith.constant 0 : i32
    return %c0_i32, %c0_i32_0 : i32, i32
  }
  func.func @transform_3(%arg0: i32) -> (i32, i32) {
    %c0_i32 = arith.constant 0 : i32
    %c0_i32_0 = arith.constant 0 : i32
    %c0_i32_1 = arith.constant 0 : i32
    return %c0_i32, %c0_i32_0 : i32, i32
  }
  func.func @transform_4(%arg0: i32) -> (i32, i32) {
    %c0_i32 = arith.constant 0 : i32
    %c0_i32_0 = arith.constant 0 : i32
    %c0_i32_1 = arith.constant 0 : i32
    return %c0_i32, %c0_i32_0 : i32, i32
  }
  func.func @transform_5(%arg0: i32) -> (i32, i32) {
    %c0_i32 = arith.constant 0 : i32
    %c0_i32_0 = arith.constant 0 : i32
    %c0_i32_1 = arith.constant 0 : i32
    return %c0_i32, %c0_i32_0 : i32, i32
  }
  func.func @transform_6(%arg0: i32) -> (i32, i32) {
    %c0_i32 = arith.constant 0 : i32
    %c0_i32_0 = arith.constant 0 : i32
    %c0_i32_1 = arith.constant 0 : i32
    return %c0_i32, %c0_i32_0 : i32, i32
  }
  func.func @transform_7(%arg0: i32) -> (i32, i32) {
    %c0_i32 = arith.constant 0 : i32
    %c0_i32_0 = arith.constant 0 : i32
    return %arg0, %c0_i32 : i32, i32
  }
}

</mosaic_0001>

<llo_original>
// kernel: tpu_custom_call.1
$region0: #{tpu_custom_call.1}
  #allocation0 [shape = 'u32[]', space=smem, size = 0x4, offset = 0x4, fixed_abs, tag = 'smem constant byte address 0x4 - core index']
  #allocation1 [shape = 'u32[144,128]{1,0:T(1,128)}', space=vmem, size = 0x12000, scoped, tag = 'internal scratch']
  #allocation2 [shape = 'f32[1,1]{1,0:T(1,128)S(1)}', space=vmem, size = 0x200, scoped, tag = 'scoped memory for tpu_custom_call.1']
  %s0 = inlined_call_operand.vmem [shape: f32[64,59], index: 0, kind: input, shape index: {}]
  %s1 = inlined_call_operand.vmem [shape: f32[59,50], index: 1, kind: input, shape index: {}]
  %s2 = inlined_call_operand.vmem [shape: f32[1,50], index: 2, kind: input, shape index: {}]
  %s3 = inlined_call_operand.vmem [shape: f32[50,20], index: 3, kind: input, shape index: {}]
  %s4 = inlined_call_operand.vmem [shape: f32[1,20], index: 4, kind: input, shape index: {}]
  %s5 = inlined_call_operand.vmem [shape: f32[1,20], index: 5, kind: input, shape index: {}]
  %s6 = inlined_call_operand.<no memory space> [shape: f32[1,1], index: 6, kind: input, shape index: {}]
  %s7 = inlined_call_operand.vmem [shape: f32[64,1], index: 7, kind: output, shape index: {}]
  %s8 = sld [smem:[#allocation0]]
  $region38: #{tpu_custom_call.1} parent=0
    _
  %s10 = ssub.s32 1, %s8
  %s11 = scalar_select 0, %s10, %s8
  %v12 = vstv %s6
  %13 = vst [vmem:[#allocation2] sm:$0x1] %v12
  // Predicated region
  $region2: #{tpu_custom_call.1} parent=0 // pred_check
    _
  $region3: #{tpu_custom_call.1} parent=0 // pred_check_branch
    %15 = sbr.rel (0) target = $region5
  $region4: #{tpu_custom_call.1} parent=0 // pred_region
    _
  $region5: #{tpu_custom_call.1} parent=0 // pred_fallthru
    _
  // Predicated region
  $region6: #{tpu_custom_call.1} parent=0 // pred_check
    _
  $region7: #{tpu_custom_call.1} parent=0 // pred_check_branch
    %17 = sbr.rel (0) target = $region9
  $region8: #{tpu_custom_call.1} parent=0 // pred_region
    _
  $region9: #{tpu_custom_call.1} parent=0 // pred_fallthru
    _
  // Predicated region
  $region10: #{tpu_custom_call.1} parent=0 // pred_check
    _
  $region11: #{tpu_custom_call.1} parent=0 // pred_check_branch
    %19 = sbr.rel (0) target = $region13
  $region12: #{tpu_custom_call.1} parent=0 // pred_region
    _
  $region13: #{tpu_custom_call.1} parent=0 // pred_fallthru
    _
  // Predicated region
  $region14: #{tpu_custom_call.1} parent=0 // pred_check
    _
  $region15: #{tpu_custom_call.1} parent=0 // pred_check_branch
    %21 = sbr.rel (0) target = $region17
  $region16: #{tpu_custom_call.1} parent=0 // pred_region
    _
  $region17: #{tpu_custom_call.1} parent=0 // pred_fallthru
    _
  // Predicated region
  $region18: #{tpu_custom_call.1} parent=0 // pred_check
    _
  $region19: #{tpu_custom_call.1} parent=0 // pred_check_branch
    %23 = sbr.rel (0) target = $region21
  $region20: #{tpu_custom_call.1} parent=0 // pred_region
    _
  $region21: #{tpu_custom_call.1} parent=0 // pred_fallthru
    _
  // Predicated region
  $region22: #{tpu_custom_call.1} parent=0 // pred_check
    _
  $region23: #{tpu_custom_call.1} parent=0 // pred_check_branch
    %25 = sbr.rel (0) target = $region25
  $region24: #{tpu_custom_call.1} parent=0 // pred_region
    _
  $region25: #{tpu_custom_call.1} parent=0 // pred_fallthru
    _
  // Predicated region
  $region26: #{tpu_custom_call.1} parent=0 // pred_check
    _
  $region27: #{tpu_custom_call.1} parent=0 // pred_check_branch
    %27 = sbr.rel (0) target = $region29
  $region28: #{tpu_custom_call.1} parent=0 // pred_region
    _
  $region29: #{tpu_custom_call.1} parent=0 // pred_fallthru
    _
  %v28 = vld [vmem:[%s0] sm:$0xff]
  %v29 = vld [vmem:[%s0 + $0x8] sm:$0xff]
  %v30 = vld [vmem:[%s0 + $0x10] sm:$0xff]
  %v31 = vld [vmem:[%s0 + $0x18] sm:$0xff]
  %v32 = vld [vmem:[%s0 + $0x20] sm:$0xff]
  %v33 = vld [vmem:[%s0 + $0x28] sm:$0xff]
  %v34 = vld [vmem:[%s0 + $0x30] sm:$0xff]
  %v35 = vld [vmem:[%s0 + $0x38] sm:$0xff]
  %v36 = vld [vmem:[%s1] sm:$0xff]
  %v37 = vld [vmem:[%s1 + $0x8] sm:$0xff]
  %v38 = vld [vmem:[%s1 + $0x10] sm:$0xff]
  %v39 = vld [vmem:[%s1 + $0x18] sm:$0xff]
  %v40 = vld [vmem:[%s1 + $0x20] sm:$0xff]
  %v41 = vld [vmem:[%s1 + $0x28] sm:$0xff]
  %v42 = vld [vmem:[%s1 + $0x30] sm:$0xff]
  %v43 = vld [vmem:[%s1 + $0x38] sm:$0x7]
  %v44 = vld [vmem:[%s2] sm:$0x1]
  %v46 = vlaneseq
  %v47 = vshrl.u32 %v46, 7
  %v48 = vsub.s32 0, %v47
  %v49 = vrot.slane %v44, %v48
  %vm51 = vcmask 482304
  %v53 = vsel %vm51, %v28, 0
  %v56 = vsel %vm51, %v29, 0
  %v59 = vsel %vm51, %v30, 0
  %v62 = vsel %vm51, %v31, 0
  %v65 = vsel %vm51, %v32, 0
  %v68 = vsel %vm51, %v33, 0
  %v71 = vsel %vm51, %v34, 0
  %v74 = vsel %vm51, %v35, 0
  %vm76 = vcmask 1042432
  %v78 = vsel %vm76, %v43, 0
  %80 = vmatprep.subr.mxu0 0.0
  %81 = vmatpush1.msra.mxu0 0.0
  %82 = vmatprep.subr.mxu0 0.0
  %83 = vmatpush1.msra.mxu0 0.0
  %84 = vmatprep.subr.mxu0 0.0
  %85 = vmatpush1.msra.mxu0 0.0
  %86 = vmatprep.subr.mxu0 0.0
  %87 = vmatpush1.msra.mxu0 0.0
  %88 = vmatprep.subr.mxu0 0.0
  %89 = vmatpush1.msra.mxu0 0.0
  %90 = vmatprep.subr.mxu0 0.0
  %91 = vmatpush1.msra.mxu0 0.0
  %92 = vmatprep.subr.mxu0 0.0
  %93 = vmatpush1.msra.mxu0 0.0
  %94 = vmatprep.subr.mxu0 0.0
  %95 = vmatpush1.msra.mxu0 0.0
  %96 = vmatprep.subr.mxu0 0.0
  %97 = vmatpush1.msra.mxu0 %v78
  %98 = vmatprep.subr.mxu0 0.0
  %99 = vmatpush1.msra.mxu0 %v42
  %100 = vmatprep.subr.mxu0 0.0
  %101 = vmatpush1.msra.mxu0 %v41
  %102 = vmatprep.subr.mxu0 0.0
  %103 = vmatpush1.msra.mxu0 %v40
  %104 = vmatprep.subr.mxu0 0.0
  %105 = vmatpush1.msra.mxu0 %v39
  %106 = vmatprep.subr.mxu0 0.0
  %107 = vmatpush1.msra.mxu0 %v38
  %108 = vmatprep.subr.mxu0 0.0
  %109 = vmatpush1.msra.mxu0 %v37
  %110 = vmatprep.subr.mxu0 0.0
  %111 = vmatpush1.msra.mxu0 %v36
  %112 = vmatprep.subr.mxu0 0.0
  %113 = vmatpush2.msra.mxu0 0.0
  %114 = vmatprep.subr.mxu0 0.0
  %115 = vmatpush2.msra.mxu0 0.0
  %116 = vmatprep.subr.mxu0 0.0
  %117 = vmatpush2.msra.mxu0 0.0
  %118 = vmatprep.subr.mxu0 0.0
  %119 = vmatpush2.msra.mxu0 0.0
  %120 = vmatprep.subr.mxu0 0.0
  %121 = vmatpush2.msra.mxu0 0.0
  %122 = vmatprep.subr.mxu0 0.0
  %123 = vmatpush2.msra.mxu0 0.0
  %124 = vmatprep.subr.mxu0 0.0
  %125 = vmatpush2.msra.mxu0 0.0
  %126 = vmatprep.subr.mxu0 0.0
  %127 = vmatpush2.msra.mxu0 0.0
  %128 = vmatprep.subr.mxu0 0.0
  %129 = vmatpush2.msra.mxu0 0.0
  %130 = vmatprep.subr.mxu0 0.0
  %131 = vmatpush2.msra.mxu0 0.0
  %132 = vmatprep.subr.mxu0 0.0
  %133 = vmatpush2.msra.mxu0 0.0
  %134 = vmatprep.subr.mxu0 0.0
  %135 = vmatpush2.msra.mxu0 0.0
  %136 = vmatprep.subr.mxu0 0.0
  %137 = vmatpush2.msra.mxu0 0.0
  %138 = vmatprep.subr.mxu0 0.0
  %139 = vmatpush2.msra.mxu0 0.0
  %140 = vmatprep.subr.mxu0 0.0
  %141 = vmatpush2.msra.mxu0 0.0
  %142 = vmatprep.subr.mxu0 0.0
  %143 = vmatpush2.msra.mxu0 0.0
  %144 = vmatprep.mubr.f32.mxu0 0.0
  %145 = vmatmul.mubr.f32.gmra.mxu0 %v53
  %v146 = vpop.f32.mrf.mxu0
  %v147 = vadd.f32 %v49, %v146
  %v148 = vpop.f32.mrf.mxu0
  %149 = vmatprep.mubr.f32.mxu0 0.0
  %150 = vmatmul.mubr.f32.gmra.mxu0 %v56
  %v151 = vpop.f32.mrf.mxu0
  %v152 = vadd.f32 %v49, %v151
  %v153 = vpop.f32.mrf.mxu0
  %154 = vmatprep.mubr.f32.mxu0 0.0
  %155 = vmatmul.mubr.f32.gmra.mxu0 %v59
  %v156 = vpop.f32.mrf.mxu0
  %v157 = vadd.f32 %v49, %v156
  %v158 = vpop.f32.mrf.mxu0
  %159 = vmatprep.mubr.f32.mxu0 0.0
  %160 = vmatmul.mubr.f32.gmra.mxu0 %v62
  %v161 = vpop.f32.mrf.mxu0
  %v162 = vadd.f32 %v49, %v161
  %v163 = vpop.f32.mrf.mxu0
  %164 = vmatprep.mubr.f32.mxu0 0.0
  %165 = vmatmul.mubr.f32.gmra.mxu0 %v65
  %v166 = vpop.f32.mrf.mxu0
  %v167 = vadd.f32 %v49, %v166
  %v168 = vpop.f32.mrf.mxu0
  %169 = vmatprep.mubr.f32.mxu0 0.0
  %170 = vmatmul.mubr.f32.gmra.mxu0 %v68
  %v171 = vpop.f32.mrf.mxu0
  %v172 = vadd.f32 %v49, %v171
  %v173 = vpop.f32.mrf.mxu0
  %174 = vmatprep.mubr.f32.mxu0 0.0
  %175 = vmatmul.mubr.f32.gmra.mxu0 %v71
  %v176 = vpop.f32.mrf.mxu0
  %v177 = vadd.f32 %v49, %v176
  %v178 = vpop.f32.mrf.mxu0
  %179 = vmatprep.mubr.f32.mxu0 0.0
  %180 = vmatmul.mubr.f32.gmra.mxu0 %v74
  %v181 = vpop.f32.mrf.mxu0
  %v182 = vadd.f32 %v49, %v181
  %v183 = vpop.f32.mrf.mxu0
  %184 = vdwg.mxu0
  %v185 = vmax.f32 %v147, 0.0
  %v186 = vmax.f32 %v152, 0.0
  %v187 = vmax.f32 %v157, 0.0
  %v188 = vmax.f32 %v162, 0.0
  %v189 = vmax.f32 %v167, 0.0
  %v190 = vmax.f32 %v172, 0.0
  %v191 = vmax.f32 %v177, 0.0
  %v192 = vmax.f32 %v182, 0.0
  %v193 = vld [vmem:[%s3] sm:$0xff]
  %v194 = vld [vmem:[%s3 + $0x8] sm:$0xff]
  %v195 = vld [vmem:[%s3 + $0x10] sm:$0xff]
  %v196 = vld [vmem:[%s3 + $0x18] sm:$0xff]
  %v197 = vld [vmem:[%s3 + $0x20] sm:$0xff]
  %v198 = vld [vmem:[%s3 + $0x28] sm:$0xff]
  %v199 = vld [vmem:[%s3 + $0x30] sm:$0x3]
  %v200 = vld [vmem:[%s4] sm:$0x1]
  %v202 = vlaneseq
  %v203 = vshrl.u32 %v202, 7
  %v204 = vsub.s32 0, %v203
  %v205 = vrot.slane %v200, %v204
  %vm207 = vcmask 408576
  %v209 = vsel %vm207, %v185, 0
  %v212 = vsel %vm207, %v186, 0
  %v215 = vsel %vm207, %v187, 0
  %v218 = vsel %vm207, %v188, 0
  %v221 = vsel %vm207, %v189, 0
  %v224 = vsel %vm207, %v190, 0
  %v227 = vsel %vm207, %v191, 0
  %v230 = vsel %vm207, %v192, 0
  %vm232 = vcmask 1041408
  %v234 = vsel %vm232, %v199, 0
  %236 = vmatprep.subr.mxu0 0.0
  %237 = vmatpush1.msra.mxu0 0.0
  %238 = vmatprep.subr.mxu0 0.0
  %239 = vmatpush1.msra.mxu0 0.0
  %240 = vmatprep.subr.mxu0 0.0
  %241 = vmatpush1.msra.mxu0 0.0
  %242 = vmatprep.subr.mxu0 0.0
  %243 = vmatpush1.msra.mxu0 0.0
  %244 = vmatprep.subr.mxu0 0.0
  %245 = vmatpush1.msra.mxu0 0.0
  %246 = vmatprep.subr.mxu0 0.0
  %247 = vmatpush1.msra.mxu0 0.0
  %248 = vmatprep.subr.mxu0 0.0
  %249 = vmatpush1.msra.mxu0 0.0
  %250 = vmatprep.subr.mxu0 0.0
  %251 = vmatpush1.msra.mxu0 0.0
  %252 = vmatprep.subr.mxu0 0.0
  %253 = vmatpush1.msra.mxu0 0.0
  %254 = vmatprep.subr.mxu0 0.0
  %255 = vmatpush1.msra.mxu0 %v234
  %256 = vmatprep.subr.mxu0 0.0
  %257 = vmatpush1.msra.mxu0 %v198
  %258 = vmatprep.subr.mxu0 0.0
  %259 = vmatpush1.msra.mxu0 %v197
  %260 = vmatprep.subr.mxu0 0.0
  %261 = vmatpush1.msra.mxu0 %v196
  %262 = vmatprep.subr.mxu0 0.0
  %263 = vmatpush1.msra.mxu0 %v195
  %264 = vmatprep.subr.mxu0 0.0
  %265 = vmatpush1.msra.mxu0 %v194
  %266 = vmatprep.subr.mxu0 0.0
  %267 = vmatpush1.msra.mxu0 %v193
  %268 = vmatprep.subr.mxu0 0.0
  %269 = vmatpush2.msra.mxu0 0.0
  %270 = vmatprep.subr.mxu0 0.0
  %271 = vmatpush2.msra.mxu0 0.0
  %272 = vmatprep.subr.mxu0 0.0
  %273 = vmatpush2.msra.mxu0 0.0
  %274 = vmatprep.subr.mxu0 0.0
  %275 = vmatpush2.msra.mxu0 0.0
  %276 = vmatprep.subr.mxu0 0.0
  %277 = vmatpush2.msra.mxu0 0.0
  %278 = vmatprep.subr.mxu0 0.0
  %279 = vmatpush2.msra.mxu0 0.0
  %280 = vmatprep.subr.mxu0 0.0
  %281 = vmatpush2.msra.mxu0 0.0
  %282 = vmatprep.subr.mxu0 0.0
  %283 = vmatpush2.msra.mxu0 0.0
  %284 = vmatprep.subr.mxu0 0.0
  %285 = vmatpush2.msra.mxu0 0.0
  %286 = vmatprep.subr.mxu0 0.0
  %287 = vmatpush2.msra.mxu0 0.0
  %288 = vmatprep.subr.mxu0 0.0
  %289 = vmatpush2.msra.mxu0 0.0
  %290 = vmatprep.subr.mxu0 0.0
  %291 = vmatpush2.msra.mxu0 0.0
  %292 = vmatprep.subr.mxu0 0.0
  %293 = vmatpush2.msra.mxu0 0.0
  %294 = vmatprep.subr.mxu0 0.0
  %295 = vmatpush2.msra.mxu0 0.0
  %296 = vmatprep.subr.mxu0 0.0
  %297 = vmatpush2.msra.mxu0 0.0
  %298 = vmatprep.subr.mxu0 0.0
  %299 = vmatpush2.msra.mxu0 0.0
  %300 = vmatprep.mubr.f32.mxu0 0.0
  %301 = vmatmul.mubr.f32.gmra.mxu0 %v209
  %v302 = vpop.f32.mrf.mxu0
  %v303 = vadd.f32 %v205, %v302
  %v304 = vpop.f32.mrf.mxu0
  %305 = vmatprep.mubr.f32.mxu0 0.0
  %306 = vmatmul.mubr.f32.gmra.mxu0 %v212
  %v307 = vpop.f32.mrf.mxu0
  %v308 = vadd.f32 %v205, %v307
  %v309 = vpop.f32.mrf.mxu0
  %310 = vmatprep.mubr.f32.mxu0 0.0
  %311 = vmatmul.mubr.f32.gmra.mxu0 %v215
  %v312 = vpop.f32.mrf.mxu0
  %v313 = vadd.f32 %v205, %v312
  %v314 = vpop.f32.mrf.mxu0
  %315 = vmatprep.mubr.f32.mxu0 0.0
  %316 = vmatmul.mubr.f32.gmra.mxu0 %v218
  %v317 = vpop.f32.mrf.mxu0
  %v318 = vadd.f32 %v205, %v317
  %v319 = vpop.f32.mrf.mxu0
  %320 = vmatprep.mubr.f32.mxu0 0.0
  %321 = vmatmul.mubr.f32.gmra.mxu0 %v221
  %v322 = vpop.f32.mrf.mxu0
  %v323 = vadd.f32 %v205, %v322
  %v324 = vpop.f32.mrf.mxu0
  %325 = vmatprep.mubr.f32.mxu0 0.0
  %326 = vmatmul.mubr.f32.gmra.mxu0 %v224
  %v327 = vpop.f32.mrf.mxu0
  %v328 = vadd.f32 %v205, %v327
  %v329 = vpop.f32.mrf.mxu0
  %330 = vmatprep.mubr.f32.mxu0 0.0
  %331 = vmatmul.mubr.f32.gmra.mxu0 %v227
  %v332 = vpop.f32.mrf.mxu0
  %v333 = vadd.f32 %v205, %v332
  %v334 = vpop.f32.mrf.mxu0
  %335 = vmatprep.mubr.f32.mxu0 0.0
  %336 = vmatmul.mubr.f32.gmra.mxu0 %v230
  %v337 = vpop.f32.mrf.mxu0
  %v338 = vadd.f32 %v205, %v337
  %v339 = vpop.f32.mrf.mxu0
  %340 = vdwg.mxu0
  %v341 = vmax.f32 %v303, 0.0
  %v342 = vmax.f32 %v308, 0.0
  %v343 = vmax.f32 %v313, 0.0
  %v344 = vmax.f32 %v318, 0.0
  %v345 = vmax.f32 %v323, 0.0
  %v346 = vmax.f32 %v328, 0.0
  %v347 = vmax.f32 %v333, 0.0
  %v348 = vmax.f32 %v338, 0.0
  %v349 = vld [vmem:[%s5] sm:$0x1]
  %v351 = vlaneseq
  %v352 = vshrl.u32 %v351, 7
  %v353 = vsub.s32 0, %v352
  %v354 = vrot.slane %v349, %v353
  %v356 = vmul.f32 %v341, %v354
  %v357 = vmul.f32 %v342, %v354
  %v358 = vmul.f32 %v343, %v354
  %v359 = vmul.f32 %v344, %v354
  %v360 = vmul.f32 %v345, %v354
  %v361 = vmul.f32 %v346, %v354
  %v362 = vmul.f32 %v347, %v354
  %v363 = vmul.f32 %v348, %v354
  %vm364 = vcmask 162816
  %v365 = vsel %vm364, %v356, 0.0
  %366 = vadd.xlane.f32.xlu0 %v365
  %v367 = vpop.xlane.xlu0 %366
  %v368 = vsel %vm364, %v357, 0.0
  %369 = vadd.xlane.f32.xlu0 %v368
  %v370 = vpop.xlane.xlu0 %369
  %v371 = vsel %vm364, %v358, 0.0
  %372 = vadd.xlane.f32.xlu0 %v371
  %v373 = vpop.xlane.xlu0 %372
  %v374 = vsel %vm364, %v359, 0.0
  %375 = vadd.xlane.f32.xlu0 %v374
  %v376 = vpop.xlane.xlu0 %375
  %v377 = vsel %vm364, %v360, 0.0
  %378 = vadd.xlane.f32.xlu0 %v377
  %v379 = vpop.xlane.xlu0 %378
  %v380 = vsel %vm364, %v361, 0.0
  %381 = vadd.xlane.f32.xlu0 %v380
  %v382 = vpop.xlane.xlu0 %381
  %v383 = vsel %vm364, %v362, 0.0
  %384 = vadd.xlane.f32.xlu0 %v383
  %v385 = vpop.xlane.xlu0 %384
  %v386 = vsel %vm364, %v363, 0.0
  %387 = vadd.xlane.f32.xlu0 %v386
  %v388 = vpop.xlane.xlu0 %387
  %v389 = vld [vmem:[#allocation2] sm:$0x1]
  %v391 = vlaneseq
  %v392 = vshrl.u32 %v391, 7
  %v393 = vsub.s32 0, %v392
  %v394 = vrot.slane %v389, %v393
  %v396 = vadd.f32 %v367, %v394
  %v397 = vadd.f32 %v370, %v394
  %v398 = vadd.f32 %v373, %v394
  %v399 = vadd.f32 %v376, %v394
  %v400 = vadd.f32 %v379, %v394
  %v401 = vadd.f32 %v382, %v394
  %v402 = vadd.f32 %v385, %v394
  %v403 = vadd.f32 %v388, %v394
  %v404 = vsub.f32 0.0, %v396
  %v405 = vsub.f32 0.0, %v397
  %v406 = vsub.f32 0.0, %v398
  %v407 = vsub.f32 0.0, %v399
  %v408 = vsub.f32 0.0, %v400
  %v409 = vsub.f32 0.0, %v401
  %v410 = vsub.f32 0.0, %v402
  %v411 = vsub.f32 0.0, %v403
  %v412 = vmul.f32 %v404, 1.442695
  %v413 = vpow.pop %v412
  %v414 = vmul.f32 %v405, 1.442695
  %v415 = vpow.pop %v414
  %v416 = vmul.f32 %v406, 1.442695
  %v417 = vpow.pop %v416
  %v418 = vmul.f32 %v407, 1.442695
  %v419 = vpow.pop %v418
  %v420 = vmul.f32 %v408, 1.442695
  %v421 = vpow.pop %v420
  %v422 = vmul.f32 %v409, 1.442695
  %v423 = vpow.pop %v422
  %v424 = vmul.f32 %v410, 1.442695
  %v425 = vpow.pop %v424
  %v426 = vmul.f32 %v411, 1.442695
  %v427 = vpow.pop %v426
  %v428 = vadd.f32 %v413, 1.0
  %v429 = vadd.f32 %v415, 1.0
  %v430 = vadd.f32 %v417, 1.0
  %v431 = vadd.f32 %v419, 1.0
  %v432 = vadd.f32 %v421, 1.0
  %v433 = vadd.f32 %v423, 1.0
  %v434 = vadd.f32 %v425, 1.0
  %v435 = vadd.f32 %v427, 1.0
  %v436 = vrcp.pop %v428
  %v437 = vrcp.pop %v429
  %v438 = vrcp.pop %v430
  %v439 = vrcp.pop %v431
  %v440 = vrcp.pop %v432
  %v441 = vrcp.pop %v433
  %v442 = vrcp.pop %v434
  %v443 = vrcp.pop %v435
  %vm444 = vcmask 7168
  %445 = vst.msk [vmem:[%s7] sm:$0xff] %vm444, %v436
  %446 = vst.msk [vmem:[%s7 + $0x8] sm:$0xff] %vm444, %v437
  %447 = vst.msk [vmem:[%s7 + $0x10] sm:$0xff] %vm444, %v438
  %448 = vst.msk [vmem:[%s7 + $0x18] sm:$0xff] %vm444, %v439
  %449 = vst.msk [vmem:[%s7 + $0x20] sm:$0xff] %vm444, %v440
  %450 = vst.msk [vmem:[%s7 + $0x28] sm:$0xff] %vm444, %v441
  %451 = vst.msk [vmem:[%s7 + $0x30] sm:$0xff] %vm444, %v442
  %452 = vst.msk [vmem:[%s7 + $0x38] sm:$0xff] %vm444, %v443
  // Predicated region
  $region30: #{tpu_custom_call.1} parent=0 // pred_check
    _
  $region31: #{tpu_custom_call.1} parent=0 // pred_check_branch
    %454 = sbr.rel (0) target = $region33
  $region32: #{tpu_custom_call.1} parent=0 // pred_region
    _
  $region33: #{tpu_custom_call.1} parent=0 // pred_fallthru
    _
  // Predicated region
  $region34: #{tpu_custom_call.1} parent=0 // pred_check
    _
  $region35: #{tpu_custom_call.1} parent=0 // pred_check_branch
    %456 = sbr.rel (0) target = $region37
  $region36: #{tpu_custom_call.1} parent=0 // pred_region
    _
  $region37: #{tpu_custom_call.1} parent=0 // pred_fallthru
    _

</llo_original>
